<compile_context>
chip_gen: v6e
topology: v6e:2x2x1
jax: 0.10.0
libtpu: 0.0.40
codegen_flags: <defaults>
</compile_context>

<pallas_src>
import functools

import jax
import jax.numpy as jnp
from jax import lax
from jax.experimental import pallas as pl
from jax.experimental.pallas import tpu as pltpu


def _gnn_kernel(node_ref, attr_ref, we_ref, be_ref, wgb_ref, out_ref, *,
                n_edges, two_h, hidden, batch, e_pad):
    # node_ref: [E_pad, 2H]     zero-padded concat(x[src], x[dst])
    # attr_ref: [B*E_pad, A]    zero-padded edge attributes, flattened
    # we_ref  : [2H + A, H]     edge_fc weight (node half on top, attr half below)
    # be_ref  : [1, H]          edge_fc bias
    # wgb_ref : [H + 1, O]      graph_fc weight with its bias folded in as last row
    # out_ref : [B, O]

    w_node = we_ref[:two_h, :]      # [2H, H]  2H is 8-sublane aligned -> free view
    w_attr = we_ref[two_h:, :]      # [A,  H]

    # Batch-invariant node half of edge_fc (+ bias), computed exactly once.
    base = jnp.dot(node_ref[...], w_node,
                   preferred_element_type=jnp.float32) + be_ref[...]      # [E_pad, H]
    # Zero padding rows (otherwise the bias would leak through ReLU into the mean).
    e_iota = lax.broadcasted_iota(jnp.int32, (e_pad, hidden), 0)
    base = jnp.where(e_iota < n_edges, base, 0.0)

    # Per-(batch, edge) attribute half: contraction over A only.
    attr_h = jnp.dot(attr_ref[...], w_attr,
                     preferred_element_type=jnp.float32)                  # [B*E_pad, H]

    # Broadcast-add base over the batch (tile-aligned reshape, E_pad % 8 == 0),
    # then ReLU on the VPU.
    h = jnp.maximum(attr_h.reshape(batch, e_pad, hidden) + base[None], 0.0)

    # Mean over each graph's edges: sublane reduce + static scale.  Padding
    # rows are exactly zero, so dividing by the true edge count is exact.
    g = jnp.sum(h, axis=1) * (1.0 / n_edges)                              # [B, H]

    # graph_fc with its bias as the last row of wgb; single [B, O] store.
    out = jnp.dot(g, wgb_ref[:hidden, :],
                  preferred_element_type=jnp.float32) + wgb_ref[hidden:, :]
    out_ref[...] = out.astype(out_ref.dtype)


@jax.jit
def gnn_forward(x, edge_index, edge_attrs, params):
    """Pallas implementation of GNNModel.forward.

    x          : [N, hidden]                 float32 node features
    edge_index : [2, E]                      int32
    edge_attrs : [B, E, edge_dim] or [B, E]  float32
    params     : dict with W_e [2H+A, H], b_e [H], W_g [H, O], b_g [O]
    returns    : [B, O] float32
    """
    if edge_attrs.ndim == 2:
        # Each 1-D edge_attr row gets unsqueeze(1) in the reference,
        # i.e. [B, E] -> [B, E, 1].
        edge_attrs = edge_attrs[..., None]

    x = x.astype(jnp.float32)
    edge_attrs = edge_attrs.astype(jnp.float32)

    B, E, A = edge_attrs.shape
    H = x.shape[-1]
    E_pad = ((E + 7) // 8) * 8        # tile-aligned edge count (sublane = 8)

    # Glue (fused under jit): gather batch-invariant endpoints, concat, pad.
    node_feat = jnp.concatenate([x[edge_index[0]], x[edge_index[1]]], axis=1)
    node_feat = jnp.pad(node_feat, ((0, E_pad - E), (0, 0)))                 # [E_pad, 2H]
    attr_flat = jnp.pad(edge_attrs,
                        ((0, 0), (0, E_pad - E), (0, 0))).reshape(B * E_pad, A)

    W_e = params["W_e"].astype(jnp.float32)                                  # [2H+A, H]
    b_e = params["b_e"].astype(jnp.float32)[None]                            # [1, H]
    W_gb = jnp.concatenate(
        [params["W_g"].astype(jnp.float32),
         params["b_g"].astype(jnp.float32)[None]], axis=0)                   # [H+1, O]
    O = W_gb.shape[-1]

    # TODO(synk): at realistic E/B, tile the B*E row dimension over a grid with
    # dimension_semantics=("parallel", ...) (2 TCs on v7x), cast the matmul
    # operands to bfloat16 with f32 accumulation (keep the VPU epilogue f32,
    # esp. on v5e), and set vmem_limit_bytes per chip generation; at these tiny
    # shapes a single un-gridded step is optimal.
    kernel = functools.partial(_gnn_kernel, n_edges=E, two_h=2 * H, hidden=H,
                               batch=B, e_pad=E_pad)
    vmem = pltpu.MemorySpace.VMEM
    out = pl.pallas_call(
        kernel,
        out_shape=jax.ShapeDtypeStruct((B, O), jnp.float32),
        in_specs=[pl.BlockSpec(memory_space=vmem)] * 5,
        out_specs=pl.BlockSpec(memory_space=vmem),
    )(node_feat, attr_flat, W_e, b_e, W_gb)
    return out                                                               # [B, O]


def gnn_forward_ref(x, edge_index, edge_attrs, params):
    """Pure-JAX reference of the same forward pass (for verification)."""
    if edge_attrs.ndim == 2:
        edge_attrs = edge_attrs[..., None]
    src = x[edge_index[0]]
    dst = x[edge_index[1]]
    B, E, _ = edge_attrs.shape
    feat = jnp.concatenate(
        [
            jnp.broadcast_to(src[None], (B, E, src.shape[-1])),
            jnp.broadcast_to(dst[None], (B, E, dst.shape[-1])),
            edge_attrs,
        ],
        axis=-1,
    )
    h = jax.nn.relu(jnp.einsum("bef,fh->beh", feat, params["W_e"]) + params["b_e"])
    g = jnp.mean(h, axis=1)                          # [B, H]
    return g @ params["W_g"] + params["b_g"]         # [B, O]


if __name__ == "__main__":
    # Shapes implied by the module / script:
    #   edge_index from the script -> E = 7 edges, N = 6 nodes
    #   edge_input_dim = 7 (selected q' features), hidden_dim = 32, output_dim = 4
    #   B = 2 edge-attribute sets in `edge_attrs`
    N, E, HIDDEN, EDGE_DIM, OUT_DIM, B = 6, 7, 32, 7, 4, 2
    F_TOTAL = 2 * HIDDEN + EDGE_DIM

    key = jax.random.PRNGKey(0)
    k_x, k_ea, k_we, k_be, k_wg, k_bg = jax.random.split(key, 6)

    x = jax.random.normal(k_x, (N, HIDDEN), dtype=jnp.float32)
    edge_index = jnp.array(
        [[0, 1, 1, 2, 2, 2, 4], [1, 2, 3, 3, 4, 5, 5]], dtype=jnp.int32
    )
    # MinMax-scaled features lie in [0, 1]; use uniform for the synthetic attrs.
    edge_attrs = jax.random.uniform(k_ea, (B, E, EDGE_DIM), dtype=jnp.float32)

    params = {
        "W_e": 0.1 * jax.random.normal(k_we, (F_TOTAL, HIDDEN), dtype=jnp.float32),
        "b_e": 0.1 * jax.random.normal(k_be, (HIDDEN,), dtype=jnp.float32),
        "W_g": 0.1 * jax.random.normal(k_wg, (HIDDEN, OUT_DIM), dtype=jnp.float32),
        "b_g": 0.1 * jax.random.normal(k_bg, (OUT_DIM,), dtype=jnp.float32),
    }

    out = gnn_forward(x, edge_index, edge_attrs, params)
    out = jax.block_until_ready(out)

    ref = gnn_forward_ref(x, edge_index, edge_attrs, params)
    assert out.shape == (B, OUT_DIM), out.shape
    assert jnp.allclose(out, ref, atol=1e-5, rtol=1e-5), (out, ref)

    print("KERNEL_OK")
</pallas_src>

<mosaic_0001>
module attributes {stable_mosaic.version = 11 : i64} {
  func.func @_gnn_kernel(%arg0: memref<8x64xf32, #tpu.memory_space<vmem>>, %arg1: memref<16x7xf32, #tpu.memory_space<vmem>>, %arg2: memref<71x32xf32, #tpu.memory_space<vmem>>, %arg3: memref<1x32xf32, #tpu.memory_space<vmem>>, %arg4: memref<33x4xf32, #tpu.memory_space<vmem>>, %arg5: memref<2x4xf32, #tpu.memory_space<vmem>>) attributes {dimension_semantics = [], scalar_prefetch = 0 : i64, scratch_operands = 0 : i64, tpu.core_type = #tpu.core_type<tc>} {
    %c0 = arith.constant 0 : index
    %c0_0 = arith.constant 0 : index
    %0 = vector.load %arg2[%c0, %c0_0] : memref<71x32xf32, #tpu.memory_space<vmem>>, vector<64x32xf32>
    %c64 = arith.constant 64 : index
    %c0_1 = arith.constant 0 : index
    %1 = vector.load %arg2[%c64, %c0_1] : memref<71x32xf32, #tpu.memory_space<vmem>>, vector<7x32xf32>
    %c0_2 = arith.constant 0 : index
    %c0_3 = arith.constant 0 : index
    %2 = vector.load %arg0[%c0_2, %c0_3] : memref<8x64xf32, #tpu.memory_space<vmem>>, vector<8x64xf32>
    %cst = arith.constant dense<0.000000e+00> : vector<8x32xf32>
    %3 = tpu.matmul %2, %0, %cst {dimension_numbers = #tpu.dot_dimension_numbers<[1], [0], [0], [1], [0, 0, 1, 1], [], []>} : vector<8x64xf32>, vector<64x32xf32>, vector<8x32xf32> -> vector<8x32xf32>
    %c0_4 = arith.constant 0 : index
    %c0_5 = arith.constant 0 : index
    %4 = vector.load %arg3[%c0_4, %c0_5] : memref<1x32xf32, #tpu.memory_space<vmem>>, vector<1x32xf32>
    %5 = vector.broadcast %4 : vector<1x32xf32> to vector<8x32xf32>
    %6 = arith.addf %3, %5 : vector<8x32xf32>
    %7 = tpu.iota {dimensions = array<i32: 0>} : vector<8x32xi32>
    %c7_i32 = arith.constant 7 : i32
    %8 = vector.broadcast %c7_i32 : i32 to vector<8x32xi32>
    %9 = arith.cmpi slt, %7, %8 : vector<8x32xi32>
    %cst_6 = arith.constant 0.000000e+00 : f32
    %10 = vector.broadcast %cst_6 : f32 to vector<8x32xf32>
    %11 = arith.select %9, %6, %10 : vector<8x32xi1>, vector<8x32xf32>
    %c0_7 = arith.constant 0 : index
    %c0_8 = arith.constant 0 : index
    %12 = vector.load %arg1[%c0_7, %c0_8] : memref<16x7xf32, #tpu.memory_space<vmem>>, vector<16x7xf32>
    %cst_9 = arith.constant dense<0.000000e+00> : vector<16x32xf32>
    %13 = tpu.matmul %12, %1, %cst_9 {dimension_numbers = #tpu.dot_dimension_numbers<[1], [0], [0], [1], [0, 0, 1, 1], [], []>} : vector<16x7xf32>, vector<7x32xf32>, vector<16x32xf32> -> vector<16x32xf32>
    %14 = vector.shape_cast %13 : vector<16x32xf32> to vector<2x8x32xf32>
    %15 = vector.shape_cast %11 : vector<8x32xf32> to vector<1x8x32xf32>
    %16 = vector.broadcast %15 : vector<1x8x32xf32> to vector<2x8x32xf32>
    %17 = arith.addf %14, %16 : vector<2x8x32xf32>
    %cst_10 = arith.constant 0.000000e+00 : f32
    %18 = vector.broadcast %cst_10 : f32 to vector<2x8x32xf32>
    %19 = arith.maximumf %17, %18 : vector<2x8x32xf32>
    %cst_11 = arith.constant dense<0.000000e+00> : vector<2x32xf32>
    %20 = vector.multi_reduction <add>, %19, %cst_11 [1] : vector<2x8x32xf32> to vector<2x32xf32>
    %cst_12 = arith.constant 0.142857149 : f32
    %21 = vector.broadcast %cst_12 : f32 to vector<2x32xf32>
    %22 = arith.mulf %20, %21 : vector<2x32xf32>
    %c0_13 = arith.constant 0 : index
    %c0_14 = arith.constant 0 : index
    %23 = vector.load %arg4[%c0_13, %c0_14] : memref<33x4xf32, #tpu.memory_space<vmem>>, vector<32x4xf32>
    %cst_15 = arith.constant dense<0.000000e+00> : vector<2x4xf32>
    %24 = tpu.matmul %22, %23, %cst_15 {dimension_numbers = #tpu.dot_dimension_numbers<[1], [0], [0], [1], [0, 0, 1, 1], [], []>} : vector<2x32xf32>, vector<32x4xf32>, vector<2x4xf32> -> vector<2x4xf32>
    %c32 = arith.constant 32 : index
    %c0_16 = arith.constant 0 : index
    %25 = vector.load %arg4[%c32, %c0_16] : memref<33x4xf32, #tpu.memory_space<vmem>>, vector<1x4xf32>
    %26 = vector.broadcast %25 : vector<1x4xf32> to vector<2x4xf32>
    %27 = arith.addf %24, %26 : vector<2x4xf32>
    %c0_17 = arith.constant 0 : index
    %c0_18 = arith.constant 0 : index
    %28 = vector.load %arg5[%c0_17, %c0_18] : memref<2x4xf32, #tpu.memory_space<vmem>>, vector<2x4xf32>
    tpu.vector_store %arg5[%c0_17, %c0_18], %27 {strides = array<i32>} : memref<2x4xf32, #tpu.memory_space<vmem>>, vector<2x4xf32>,
    return
  }
}

</mosaic_0001>

<llo_original>
// kernel: gnn_forward.1
$region0: #{gnn_forward.1}
  #allocation0 [shape = 'u32[]', space=smem, size = 0x4, offset = 0x4, fixed_abs, tag = 'smem constant byte address 0x4 - core index']
  #allocation1 [shape = 'u32[144,128]{1,0:T(1,128)}', space=vmem, size = 0x12000, scoped, tag = 'internal scratch']
  %s0 = inlined_call_operand.vmem [shape: f32[8,64], index: 0, kind: input, shape index: {}]
  %s1 = inlined_call_operand.vmem [shape: f32[16,7], index: 1, kind: input, shape index: {}]
  %s2 = inlined_call_operand.vmem [shape: f32[71,32], index: 2, kind: input, shape index: {}]
  %s3 = inlined_call_operand.vmem [shape: f32[1,32], index: 3, kind: input, shape index: {}]
  %s4 = inlined_call_operand.vmem [shape: f32[33,4], index: 4, kind: input, shape index: {}]
  %s5 = inlined_call_operand.hbm [shape: f32[2,4], index: 5, kind: output, shape index: {}]
  %s6 = sld [smem:[#allocation0]]
  $region30: #{gnn_forward.1} parent=0
    _
  %s8 = ssub.s32 1, %s6
  %s9 = scalar_select 0, %s8, %s6
  $region1: #{gnn_forward.1} parent=0
    #allocation2 [shape = 'u8[1024]{0}', space=vmem, size = 0x400, scoped, tag = 'output window, operand 0, single buffered']
    #allocation3 [shape = 's32[1]{0}', space=sflag, size = 0x4, scoped, tag = 'scoped memory for gnn_forward.1']
    %10 = vsyncpa [#allocation3], 0
    // Predicated region
    $region2: #{gnn_forward.1} parent=1 // pred_check
      _
    $region3: #{gnn_forward.1} parent=1 // pred_check_branch
      %12 = sbr.rel (0) target = $region5
    $region4: #{gnn_forward.1} parent=1 // pred_region
      _
    $region5: #{gnn_forward.1} parent=1 // pred_fallthru
      _
    // Predicated region
    $region6: #{gnn_forward.1} parent=1 // pred_check
      _
    $region7: #{gnn_forward.1} parent=1 // pred_check_branch
      %14 = sbr.rel (0) target = $region9
    $region8: #{gnn_forward.1} parent=1 // pred_region
      _
    $region9: #{gnn_forward.1} parent=1 // pred_fallthru
      _
    // Predicated region
    $region10: #{gnn_forward.1} parent=1 // pred_check
      _
    $region11: #{gnn_forward.1} parent=1 // pred_check_branch
      %16 = sbr.rel (0) target = $region13
    $region12: #{gnn_forward.1} parent=1 // pred_region
      _
    $region13: #{gnn_forward.1} parent=1 // pred_fallthru
      _
    // Predicated region
    $region14: #{gnn_forward.1} parent=1 // pred_check
      _
    $region15: #{gnn_forward.1} parent=1 // pred_check_branch
      %18 = sbr.rel (0) target = $region17
    $region16: #{gnn_forward.1} parent=1 // pred_region
      _
    $region17: #{gnn_forward.1} parent=1 // pred_fallthru
      _
    // Predicated region
    $region18: #{gnn_forward.1} parent=1 // pred_check
      _
    $region19: #{gnn_forward.1} parent=1 // pred_check_branch
      %20 = sbr.rel (0) target = $region21
    $region20: #{gnn_forward.1} parent=1 // pred_region
      _
    $region21: #{gnn_forward.1} parent=1 // pred_fallthru
      _
    %v21 = vld [vmem:[%s2] sm:$0xff]
    %v22 = vld [vmem:[%s2 + $0x8] sm:$0xff]
    %v23 = vld [vmem:[%s2 + $0x10] sm:$0xff]
    %v24 = vld [vmem:[%s2 + $0x18] sm:$0xff]
    %v25 = vld [vmem:[%s2 + $0x20] sm:$0xff]
    %v26 = vld [vmem:[%s2 + $0x28] sm:$0xff]
    %v27 = vld [vmem:[%s2 + $0x30] sm:$0xff]
    %v28 = vld [vmem:[%s2 + $0x38] sm:$0xff]
    %v29 = vld [vmem:[%s2 + $0x40] sm:$0x7f]
    %v30 = vld [vmem:[%s0] sm:$0xff]
    %v31 = vld [vmem:[%s3] sm:$0x1]
    %v33 = vlaneseq
    %v34 = vshrl.u32 %v33, 7
    %v35 = vsub.s32 0, %v34
    %v36 = vrot.slane %v31, %v35
    %vm38 = vcmask 523264
    %v40 = vsel %vm38, %v30, 0
    %42 = vmatprep.subr.mxu0 0.0
    %43 = vmatpush1.msra.mxu0 0.0
    %44 = vmatprep.subr.mxu0 0.0
    %45 = vmatpush1.msra.mxu0 0.0
    %46 = vmatprep.subr.mxu0 0.0
    %47 = vmatpush1.msra.mxu0 0.0
    %48 = vmatprep.subr.mxu0 0.0
    %49 = vmatpush1.msra.mxu0 0.0
    %50 = vmatprep.subr.mxu0 0.0
    %51 = vmatpush1.msra.mxu0 0.0
    %52 = vmatprep.subr.mxu0 0.0
    %53 = vmatpush1.msra.mxu0 0.0
    %54 = vmatprep.subr.mxu0 0.0
    %55 = vmatpush1.msra.mxu0 0.0
    %56 = vmatprep.subr.mxu0 0.0
    %57 = vmatpush1.msra.mxu0 0.0
    %58 = vmatprep.subr.mxu0 0.0
    %59 = vmatpush1.msra.mxu0 %v28
    %60 = vmatprep.subr.mxu0 0.0
    %61 = vmatpush1.msra.mxu0 %v27
    %62 = vmatprep.subr.mxu0 0.0
    %63 = vmatpush1.msra.mxu0 %v26
    %64 = vmatprep.subr.mxu0 0.0
    %65 = vmatpush1.msra.mxu0 %v25
    %66 = vmatprep.subr.mxu0 0.0
    %67 = vmatpush1.msra.mxu0 %v24
    %68 = vmatprep.subr.mxu0 0.0
    %69 = vmatpush1.msra.mxu0 %v23
    %70 = vmatprep.subr.mxu0 0.0
    %71 = vmatpush1.msra.mxu0 %v22
    %72 = vmatprep.subr.mxu0 0.0
    %73 = vmatpush1.msra.mxu0 %v21
    %74 = vmatprep.subr.mxu0 0.0
    %75 = vmatpush2.msra.mxu0 0.0
    %76 = vmatprep.subr.mxu0 0.0
    %77 = vmatpush2.msra.mxu0 0.0
    %78 = vmatprep.subr.mxu0 0.0
    %79 = vmatpush2.msra.mxu0 0.0
    %80 = vmatprep.subr.mxu0 0.0
    %81 = vmatpush2.msra.mxu0 0.0
    %82 = vmatprep.subr.mxu0 0.0
    %83 = vmatpush2.msra.mxu0 0.0
    %84 = vmatprep.subr.mxu0 0.0
    %85 = vmatpush2.msra.mxu0 0.0
    %86 = vmatprep.subr.mxu0 0.0
    %87 = vmatpush2.msra.mxu0 0.0
    %88 = vmatprep.subr.mxu0 0.0
    %89 = vmatpush2.msra.mxu0 0.0
    %90 = vmatprep.subr.mxu0 0.0
    %91 = vmatpush2.msra.mxu0 0.0
    %92 = vmatprep.subr.mxu0 0.0
    %93 = vmatpush2.msra.mxu0 0.0
    %94 = vmatprep.subr.mxu0 0.0
    %95 = vmatpush2.msra.mxu0 0.0
    %96 = vmatprep.subr.mxu0 0.0
    %97 = vmatpush2.msra.mxu0 0.0
    %98 = vmatprep.subr.mxu0 0.0
    %99 = vmatpush2.msra.mxu0 0.0
    %100 = vmatprep.subr.mxu0 0.0
    %101 = vmatpush2.msra.mxu0 0.0
    %102 = vmatprep.subr.mxu0 0.0
    %103 = vmatpush2.msra.mxu0 0.0
    %104 = vmatprep.subr.mxu0 0.0
    %105 = vmatpush2.msra.mxu0 0.0
    %106 = vmatprep.mubr.f32.mxu0 0.0
    %107 = vmatmul.mubr.f32.gmra.mxu0 %v40
    %v108 = vpop.f32.mrf.mxu0
    %v109 = vadd.f32 %v36, %v108
    %v110 = vpop.f32.mrf.mxu0
    %111 = vdwg.mxu0
    %v112 = vlaneseq
    %v113 = vshrl.u32 %v112, 7
    %vm114 = vcmp.lt.s32.totalorder %v113, 7
    %v115 = vsel %vm114, %v109, 0.0
    %v116 = vld [vmem:[%s1] sm:$0xff]
    %v117 = vld [vmem:[%s1 + $0x8] sm:$0xff]
    %vm118 = vcmask 56320
    %v120 = vsel %vm118, %v116, 0
    %v123 = vsel %vm118, %v117, 0
    %vm125 = vcmask 1046528
    %v127 = vsel %vm125, %v29, 0
    %129 = vmatprep.subr.mxu0 0.0
    %130 = vmatpush1.msra.mxu0 0.0
    %131 = vmatprep.subr.mxu0 0.0
    %132 = vmatpush1.msra.mxu0 0.0
    %133 = vmatprep.subr.mxu0 0.0
    %134 = vmatpush1.msra.mxu0 0.0
    %135 = vmatprep.subr.mxu0 0.0
    %136 = vmatpush1.msra.mxu0 0.0
    %137 = vmatprep.subr.mxu0 0.0
    %138 = vmatpush1.msra.mxu0 0.0
    %139 = vmatprep.subr.mxu0 0.0
    %140 = vmatpush1.msra.mxu0 0.0
    %141 = vmatprep.subr.mxu0 0.0
    %142 = vmatpush1.msra.mxu0 0.0
    %143 = vmatprep.subr.mxu0 0.0
    %144 = vmatpush1.msra.mxu0 0.0
    %145 = vmatprep.subr.mxu0 0.0
    %146 = vmatpush1.msra.mxu0 0.0
    %147 = vmatprep.subr.mxu0 0.0
    %148 = vmatpush1.msra.mxu0 0.0
    %149 = vmatprep.subr.mxu0 0.0
    %150 = vmatpush1.msra.mxu0 0.0
    %151 = vmatprep.subr.mxu0 0.0
    %152 = vmatpush1.msra.mxu0 0.0
    %153 = vmatprep.subr.mxu0 0.0
    %154 = vmatpush1.msra.mxu0 0.0
    %155 = vmatprep.subr.mxu0 0.0
    %156 = vmatpush1.msra.mxu0 0.0
    %157 = vmatprep.subr.mxu0 0.0
    %158 = vmatpush1.msra.mxu0 0.0
    %159 = vmatprep.subr.mxu0 0.0
    %160 = vmatpush1.msra.mxu0 %v127
    %161 = vmatprep.subr.mxu0 0.0
    %162 = vmatpush2.msra.mxu0 0.0
    %163 = vmatprep.subr.mxu0 0.0
    %164 = vmatpush2.msra.mxu0 0.0
    %165 = vmatprep.subr.mxu0 0.0
    %166 = vmatpush2.msra.mxu0 0.0
    %167 = vmatprep.subr.mxu0 0.0
    %168 = vmatpush2.msra.mxu0 0.0
    %169 = vmatprep.subr.mxu0 0.0
    %170 = vmatpush2.msra.mxu0 0.0
    %171 = vmatprep.subr.mxu0 0.0
    %172 = vmatpush2.msra.mxu0 0.0
    %173 = vmatprep.subr.mxu0 0.0
    %174 = vmatpush2.msra.mxu0 0.0
    %175 = vmatprep.subr.mxu0 0.0
    %176 = vmatpush2.msra.mxu0 0.0
    %177 = vmatprep.subr.mxu0 0.0
    %178 = vmatpush2.msra.mxu0 0.0
    %179 = vmatprep.subr.mxu0 0.0
    %180 = vmatpush2.msra.mxu0 0.0
    %181 = vmatprep.subr.mxu0 0.0
    %182 = vmatpush2.msra.mxu0 0.0
    %183 = vmatprep.subr.mxu0 0.0
    %184 = vmatpush2.msra.mxu0 0.0
    %185 = vmatprep.subr.mxu0 0.0
    %186 = vmatpush2.msra.mxu0 0.0
    %187 = vmatprep.subr.mxu0 0.0
    %188 = vmatpush2.msra.mxu0 0.0
    %189 = vmatprep.subr.mxu0 0.0
    %190 = vmatpush2.msra.mxu0 0.0
    %191 = vmatprep.subr.mxu0 0.0
    %192 = vmatpush2.msra.mxu0 0.0
    %193 = vmatprep.mubr.f32.mxu0 0.0
    %194 = vmatmul.mubr.f32.gmra.mxu0 %v120
    %v195 = vpop.f32.mrf.mxu0
    %v196 = vadd.f32 0.0, %v195
    %v197 = vpop.f32.mrf.mxu0
    %198 = vmatprep.mubr.f32.mxu0 0.0
    %199 = vmatmul.mubr.f32.gmra.mxu0 %v123
    %v200 = vpop.f32.mrf.mxu0
    %v201 = vadd.f32 0.0, %v200
    %v202 = vpop.f32.mrf.mxu0
    %203 = vdwg.mxu0
    %v204 = vadd.f32 %v196, %v115
    %v205 = vadd.f32 %v201, %v115
    %v206 = vmax.f32 %v204, 0.0
    %v207 = vmax.f32 %v205, 0.0
    %vm208 = vcmask 261120
    %v209 = vsel %vm208, %v206, 0.0
    %v210 = vrot.slane %v209, 4
    %v211 = vadd.f32 %v209, %v210
    %v212 = vrot.slane %v211, 2
    %v213 = vadd.f32 %v211, %v212
    %v214 = vrot.slane %v213, 1
    %v215 = vadd.f32 %v213, %v214
    %v216 = vsel %vm208, %v207, 0.0
    %v217 = vrot.slane %v216, 4
    %v218 = vadd.f32 %v216, %v217
    %v219 = vrot.slane %v218, 2
    %v220 = vadd.f32 %v218, %v219
    %v221 = vrot.slane %v220, 1
    %v222 = vadd.f32 %v220, %v221
    %v223 = vmul.f32 %v215, 0.14285715
    %v224 = vmul.f32 %v222, 0.14285715
    %v225 = vld [vmem:[%s4] sm:$0xff]
    %v226 = vld [vmem:[%s4 + $0x8] sm:$0xff]
    %v227 = vld [vmem:[%s4 + $0x10] sm:$0xff]
    %v228 = vld [vmem:[%s4 + $0x18] sm:$0xff]
    %v229 = vld [vmem:[%s4 + $0x20] sm:$0x1]
    %v230 = vlaneseq
    %v231 = vshrl.u32 %v230, 7
    %v232 = vsub.s32 0, %v231
    %v233 = vrot.slane %v229, %v232
    %vm236 = vcmask 1041409
    %v237 = vsel %vm236, %v224, %v223
    %v238 = vsel %vm208, %v237, 0
    %240 = vmatprep.subr.mxu0 0.0
    %241 = vmatpush1.msra.mxu0 0.0
    %242 = vmatprep.subr.mxu0 0.0
    %243 = vmatpush1.msra.mxu0 0.0
    %244 = vmatprep.subr.mxu0 0.0
    %245 = vmatpush1.msra.mxu0 0.0
    %246 = vmatprep.subr.mxu0 0.0
    %247 = vmatpush1.msra.mxu0 0.0
    %248 = vmatprep.subr.mxu0 0.0
    %249 = vmatpush1.msra.mxu0 0.0
    %250 = vmatprep.subr.mxu0 0.0
    %251 = vmatpush1.msra.mxu0 0.0
    %252 = vmatprep.subr.mxu0 0.0
    %253 = vmatpush1.msra.mxu0 0.0
    %254 = vmatprep.subr.mxu0 0.0
    %255 = vmatpush1.msra.mxu0 0.0
    %256 = vmatprep.subr.mxu0 0.0
    %257 = vmatpush1.msra.mxu0 0.0
    %258 = vmatprep.subr.mxu0 0.0
    %259 = vmatpush1.msra.mxu0 0.0
    %260 = vmatprep.subr.mxu0 0.0
    %261 = vmatpush1.msra.mxu0 0.0
    %262 = vmatprep.subr.mxu0 0.0
    %263 = vmatpush1.msra.mxu0 0.0
    %264 = vmatprep.subr.mxu0 0.0
    %265 = vmatpush1.msra.mxu0 %v228
    %266 = vmatprep.subr.mxu0 0.0
    %267 = vmatpush1.msra.mxu0 %v227
    %268 = vmatprep.subr.mxu0 0.0
    %269 = vmatpush1.msra.mxu0 %v226
    %270 = vmatprep.subr.mxu0 0.0
    %271 = vmatpush1.msra.mxu0 %v225
    %272 = vmatprep.subr.mxu0 0.0
    %273 = vmatpush2.msra.mxu0 0.0
    %274 = vmatprep.subr.mxu0 0.0
    %275 = vmatpush2.msra.mxu0 0.0
    %276 = vmatprep.subr.mxu0 0.0
    %277 = vmatpush2.msra.mxu0 0.0
    %278 = vmatprep.subr.mxu0 0.0
    %279 = vmatpush2.msra.mxu0 0.0
    %280 = vmatprep.subr.mxu0 0.0
    %281 = vmatpush2.msra.mxu0 0.0
    %282 = vmatprep.subr.mxu0 0.0
    %283 = vmatpush2.msra.mxu0 0.0
    %284 = vmatprep.subr.mxu0 0.0
    %285 = vmatpush2.msra.mxu0 0.0
    %286 = vmatprep.subr.mxu0 0.0
    %287 = vmatpush2.msra.mxu0 0.0
    %288 = vmatprep.subr.mxu0 0.0
    %289 = vmatpush2.msra.mxu0 0.0
    %290 = vmatprep.subr.mxu0 0.0
    %291 = vmatpush2.msra.mxu0 0.0
    %292 = vmatprep.subr.mxu0 0.0
    %293 = vmatpush2.msra.mxu0 0.0
    %294 = vmatprep.subr.mxu0 0.0
    %295 = vmatpush2.msra.mxu0 0.0
    %296 = vmatprep.subr.mxu0 0.0
    %297 = vmatpush2.msra.mxu0 0.0
    %298 = vmatprep.subr.mxu0 0.0
    %299 = vmatpush2.msra.mxu0 0.0
    %300 = vmatprep.subr.mxu0 0.0
    %301 = vmatpush2.msra.mxu0 0.0
    %302 = vmatprep.subr.mxu0 0.0
    %303 = vmatpush2.msra.mxu0 0.0
    %304 = vmatprep.mubr.f32.mxu0 0.0
    %305 = vmatmul.mubr.f32.gmra.mxu0 %v238
    %v306 = vpop.f32.mrf.mxu0
    %v307 = vadd.f32 %v233, %v306
    %v308 = vpop.f32.mrf.mxu0
    %309 = vdwg.mxu0
    %vm310 = vcmask 25600
    %311 = vst.msk [vmem:[#allocation2] sm:$0x3] %vm310, %v307
    // Predicated region
    $region22: #{gnn_forward.1} parent=1 // pred_check
      _
    $region23: #{gnn_forward.1} parent=1 // pred_check_branch
      %313 = sbr.rel (0) target = $region25
    $region24: #{gnn_forward.1} parent=1 // pred_region
      %s315 = ssub.s32 32, 32
      %316 = vsyncadd [#allocation3], %s315
      %s318 = sshll.u32 [#allocation2], 4
      %s319 = int_to_ptr.vmem [resolvable:$true] %s318
      %321 = dma.vmem_to_hbm [thread:$0]  %s319, 32, %s5, [#allocation3]
    $region25: #{gnn_forward.1} parent=1 // pred_fallthru
      _
    // Predicated region
    $region26: #{gnn_forward.1} parent=1 // pred_check
      _
    $region27: #{gnn_forward.1} parent=1 // pred_check_branch
      %323 = sbr.rel (0) target = $region29
    $region28: #{gnn_forward.1} parent=1 // pred_region
      %324 = dma.done [#allocation3], 32
    $region29: #{gnn_forward.1} parent=1 // pred_fallthru
      _
    %325 = vsyncpa [#allocation3], 1

</llo_original>
